<compile_context>
chip_gen: v7x
topology: tpu7x:2x2x1
jax: 0.10.0
libtpu: 0.0.40
codegen_flags: <defaults>
</compile_context>

<pallas_src>
import functools

import jax
import jax.numpy as jnp
from jax.experimental import pallas as pl
from jax.experimental.pallas import tpu as pltpu

_LANE = 128
_CHUNK_BYTES = 4 * 1024 * 1024     # per-VMEM-buffer cap for the table chunk
_MAX_FANOUT = 8                    # DMA-semaphore ring size (copies in flight)


def _fanout_kernel(chunk_ref, out_ref, sems, *, batch, tb, tf, tail, nf_full):
    """Replicate the current table chunk into `tb` batch rows of the HBM output.

    chunk_ref: (1, tf) VMEM  -- auto-pipelined chunk of the flattened table.
    out_ref:   (B, flat_len) HBM (memory_space=pl.ANY) -- written only via DMA.
    sems:      (tb,) DMA semaphores.
    """
    f = pl.program_id(0)
    bt = pl.program_id(1)
    col0 = f * tf
    if tf % _LANE == 0:
        col0 = pl.multiple_of(col0, _LANE)

    def fan_out(width):
        def desc(slot, row):
            return pltpu.make_async_copy(
                chunk_ref.at[pl.ds(0, 1), pl.ds(0, width)],
                out_ref.at[pl.ds(row, 1), pl.ds(col0, width)],
                sems.at[slot],
            )

        guard = (batch % tb) != 0

        def run(slot, row, do_start):
            if do_start:
                desc(slot, row).start()
            else:
                desc(slot, row).wait()

        # Issue every copy for this batch tile first, then wait on all of them,
        # so up to `tb` DMAs overlap and none outlive the grid step (the VMEM
        # chunk buffer may be recycled afterwards by the input pipeline).
        for do_start in (True, False):
            for slot in range(tb):
                row = bt * tb + slot
                if guard:
                    @pl.when(row < batch)
                    def _():
                        run(slot, row, do_start)
                else:
                    run(slot, row, do_start)

    if tail == 0:
        fan_out(tf)
    else:
        @pl.when(f < nf_full)
        def _():
            fan_out(tf)

        @pl.when(f == nf_full)
        def _():
            fan_out(tail)


def _choose_flat_tile(flat_len: int, itemsize: int) -> int:
    max_elems = max(_LANE, _CHUNK_BYTES // itemsize)
    if flat_len <= max_elems:
        return flat_len                      # full dim -> always a legal block
    return (max_elems // _LANE) * _LANE      # large multiple of 128


def _choose_batch_tile(batch: int) -> int:
    if batch <= 1:
        return 1
    # >= 2 batch tiles so the grid never collapses to (1, 1); capped at the
    # DMA-semaphore ring size.
    return min(_MAX_FANOUT, (batch + 1) // 2)


@jax.jit
def positional_embedding(input_ids: jax.Array, embedding_table: jax.Array) -> jax.Array:
    """Returns positional embeddings of shape (B, S, E), matching the PyTorch module."""
    batch_size, seq_length = input_ids.shape
    max_seq_length, embed_dim = embedding_table.shape
    assert seq_length <= max_seq_length

    flat_len = seq_length * embed_dim
    itemsize = embedding_table.dtype.itemsize
    # Rows [0, S) of the table, flattened into one contiguous lane-dense row.
    flat_table = embedding_table[:seq_length].reshape(1, flat_len)

    tf = _choose_flat_tile(flat_len, itemsize)
    tb = _choose_batch_tile(batch_size)
    nf_full, tail = divmod(flat_len, tf)
    nf_total = nf_full + (1 if tail else 0)
    nb = pl.cdiv(batch_size, tb)

    kernel = functools.partial(
        _fanout_kernel, batch=batch_size, tb=tb, tf=tf, tail=tail, nf_full=nf_full
    )

    out_flat = pl.pallas_call(
        kernel,
        out_shape=jax.ShapeDtypeStruct((batch_size, flat_len), embedding_table.dtype),
        grid_spec=pltpu.PrefetchScalarGridSpec(
            num_scalar_prefetch=0,
            grid=(nf_total, nb),
            in_specs=[
                # (1, tf) VMEM window of the flattened table; depends only on
                # the LEADING f axis, so it is not re-fetched per batch tile.
                pl.BlockSpec((1, tf), lambda f, b: (0, f)),
            ],
            # Output stays in HBM; written exclusively via explicit DMA.
            out_specs=pl.BlockSpec(memory_space=pl.ANY),
            scratch_shapes=[pltpu.SemaphoreType.DMA((tb,))],
        ),
        compiler_params=pltpu.CompilerParams(
            dimension_semantics=("parallel", "parallel"),
        ),
        cost_estimate=pl.CostEstimate(
            flops=0,
            transcendentals=0,
            bytes_accessed=(batch_size * flat_len + flat_len) * itemsize,
        ),
    )(flat_table)

    # Free (contiguous, metadata-only) reshape back to (B, S, E).
    return out_flat.reshape(batch_size, seq_length, embed_dim)


if __name__ == "__main__":
    # Small, module-consistent shapes.
    batch_size = 2
    seq_length = 8
    max_seq_length = 16
    embed_dim = 32

    key = jax.random.PRNGKey(0)
    k_w, k_ids = jax.random.split(key)

    # Deterministic parameter init: nn.init.normal_(weight, mean=0.0, std=0.02)
    embedding_table = (
        0.02 * jax.random.normal(k_w, (max_seq_length, embed_dim), dtype=jnp.float32)
    )

    # Token ids — values are irrelevant to the forward pass (only shape matters).
    input_ids = jax.random.randint(
        k_ids, (batch_size, seq_length), 0, max_seq_length, dtype=jnp.int32
    )

    out = positional_embedding(input_ids, embedding_table)
    out = jax.block_until_ready(out)

    # Reference check in plain JAX (embedding lookup with arange positions).
    position_ids = jnp.broadcast_to(
        jnp.arange(seq_length, dtype=jnp.int32)[None, :], (batch_size, seq_length)
    )
    ref = jnp.take(embedding_table, position_ids, axis=0)

    assert out.shape == (batch_size, seq_length, embed_dim), out.shape
    assert out.dtype == jnp.float32, out.dtype
    assert jnp.allclose(out, ref), "mismatch vs reference"

    print("KERNEL_OK")
</pallas_src>

<mosaic_0001>
module attributes {stable_mosaic.version = 11 : i64} {
  func.func @_fanout_kernel(%arg0: i32, %arg1: i32, %arg2: memref<1x256xf32, #tpu.memory_space<vmem>>, %arg3: memref<2x256xf32, #tpu.memory_space<any>>, %arg4: memref<1x!tpu.dma_semaphore, #tpu.memory_space<semaphore_mem>>) attributes {dimension_semantics = [#tpu.dimension_semantics<parallel>, #tpu.dimension_semantics<parallel>], iteration_bounds = array<i64: 1, 2>, scalar_prefetch = 0 : i64, scratch_operands = 1 : i64, tpu.core_type = #tpu.core_type<tc>, window_params = [{transform_indices = @transform_0, window_bounds = array<i64: 1, 256>}, {}]} {
    %c256_i32 = arith.constant 256 : i32
    %0 = arith.muli %arg0, %c256_i32 : i32
    %1 = tpu.assume_multiple %0, 128 : i32
    %c1_i32 = arith.constant 1 : i32
    %2 = arith.muli %arg1, %c1_i32 : i32
    %c0_i32 = arith.constant 0 : i32
    %3 = arith.addi %2, %c0_i32 : i32
    %c0_i32_0 = arith.constant 0 : i32
    %c0_i32_1 = arith.constant 0 : i32
    %c0_i32_2 = arith.constant 0 : i32
    %4 = tpu.memref_slice %arg2[%c0_i32_1, %c0_i32_2] : memref<1x256xf32, #tpu.memory_space<vmem>> -> memref<1x256xf32, #tpu.memory_space<vmem>>
    %5 = tpu.memref_slice %arg3[%3, %1] : memref<2x256xf32, #tpu.memory_space<any>> -> memref<1x256xf32, #tpu.memory_space<any>>
    %6 = tpu.memref_slice %arg4[%c0_i32_0] : memref<1x!tpu.dma_semaphore, #tpu.memory_space<semaphore_mem>> -> memref<1x!tpu.dma_semaphore, #tpu.memory_space<semaphore_mem>>
    %7 = tpu.memref_squeeze %6 : memref<1x!tpu.dma_semaphore, #tpu.memory_space<semaphore_mem>> -> memref<!tpu.dma_semaphore, #tpu.memory_space<semaphore_mem>>
    tpu.enqueue_dma source(%4 : memref<1x256xf32, #tpu.memory_space<vmem>>) target(%5 : memref<1x256xf32, #tpu.memory_space<any>>) target_semaphore(%7 : memref<!tpu.dma_semaphore, #tpu.memory_space<semaphore_mem>>)
    %c1_i32_3 = arith.constant 1 : i32
    %8 = arith.muli %arg1, %c1_i32_3 : i32
    %c0_i32_4 = arith.constant 0 : i32
    %9 = arith.addi %8, %c0_i32_4 : i32
    %c0_i32_5 = arith.constant 0 : i32
    %c0_i32_6 = arith.constant 0 : i32
    %c0_i32_7 = arith.constant 0 : i32
    %10 = tpu.memref_slice %arg2[%c0_i32_6, %c0_i32_7] : memref<1x256xf32, #tpu.memory_space<vmem>> -> memref<1x256xf32, #tpu.memory_space<vmem>>
    %11 = tpu.memref_slice %arg3[%9, %1] : memref<2x256xf32, #tpu.memory_space<any>> -> memref<1x256xf32, #tpu.memory_space<any>>
    %12 = tpu.memref_slice %arg4[%c0_i32_5] : memref<1x!tpu.dma_semaphore, #tpu.memory_space<semaphore_mem>> -> memref<1x!tpu.dma_semaphore, #tpu.memory_space<semaphore_mem>>
    %13 = tpu.memref_squeeze %12 : memref<1x!tpu.dma_semaphore, #tpu.memory_space<semaphore_mem>> -> memref<!tpu.dma_semaphore, #tpu.memory_space<semaphore_mem>>
    tpu.wait_dma2 semaphore(%13 : memref<!tpu.dma_semaphore, #tpu.memory_space<semaphore_mem>>) src(%10 : memref<1x256xf32, #tpu.memory_space<vmem>>) dst(%11 : memref<1x256xf32, #tpu.memory_space<any>>)
    return
  }
  func.func @transform_0(%arg0: i32, %arg1: i32) -> (i32, i32) {
    %c0_i32 = arith.constant 0 : i32
    %c0_i32_0 = arith.constant 0 : i32
    return %c0_i32, %arg0 : i32, i32
  }
}

</mosaic_0001>

<llo_original>
// kernel: positional_embedding.1
$region0: #{positional_embedding.1}
  #allocation0 [shape = 'u32[]', space=smem, size = 0x4, offset = 0x4, fixed_abs, tag = 'smem constant byte address 0x4 - core index']
  #allocation1 [shape = 'u32[144,128]{1,0:T(1,128)}', space=vmem, size = 0x12000, scoped, tag = 'internal scratch']
  #allocation2 [shape = 's32[1]{0}', space=sflag, size = 0x4, scoped, tag = 'scratch operand']
  #allocation3 [shape = 's32[]', space=sflag, size = 0x4, offset = 0, fixed_abs, tag = 'sflag constant byte address 0x0 - dummy sync flag']
  %s0 = inlined_call_operand.vmem [shape: f32[1,256], index: 0, kind: input, shape index: {}]
  %s1 = inlined_call_operand.vmem [shape: f32[2,256], index: 1, kind: output, shape index: {}]
  %s2 = sld [smem:[#allocation0]]
  $region55: #{positional_embedding.1} parent=0
    _
  %s4 = ssub.s32 1, %s2
  %s5 = scalar_select 0, %s4, %s2
  loop: start=0, step=1, limit=3
  $region2: #{positional_embedding.1} parent=0 // loop_pre_header
    _
  $region3: #{positional_embedding.1} parent=0 // loop_header
    %s7 = sphi 0, %s11
    %p8 = scmp.ge.s32.totalorder %s7, 3
    %s13 = sphi 0, %s23
    %s14 = sphi 0, %s19
    %s15 = sphi 0, %s13
    %s16 = sphi 0, %s14
    %s26 = sphi 0, %s28
    %s29 = sphi 0, %s26
    %s39 = sphi 0, %s29
  $region4: #{positional_embedding.1} parent=0 // loop_header_branch
    %10 = sbr.rel (%p8) target = $region8
  $region5: #{positional_embedding.1} parent=0 // loop_body
    %s12 = ssub.s32 %s7, 1
    %s17 = sadd.s32 1, %s14
    %p18 = scmp.ge.s32.totalorder %s17, 2
    %s19 = scalar_select %p18, 0, %s17
    %s20 = sadd.s32 1, %s13
    %s21 = scalar_select %p18, %s20, %s13
    %p22 = scmp.ge.s32.totalorder %s21, 1
    %s23 = scalar_select %p22, 0, %s21
    %s24 = ssub.s32 %s13, %s23
    %p25 = scmp.eq.s32.totalorder %s24, 0
    %s27 = sadd.s32 %s26, 1
    %s28 = scalar_select %p25, %s26, %s27
    %p30 = pneg %p25
    %p31 = scmp.eq.s32.totalorder %s7, 1
    %p32 = por %p30, %p31
    %p33 = scmp.ne.s32.totalorder %s26, %s29
    %p34 = scmp.eq.s32.totalorder %s7, 0
    %p35 = por %p33, %p34
    %p36 = scmp.ne.s32.totalorder %s26, %s29
    %p37 = scmp.eq.s32.totalorder %s12, 1
    %p38 = por %p36, %p37
    %p40 = scmp.ne.s32.totalorder %s29, %s39
    %p41 = scmp.eq.s32.totalorder %s12, 0
    %p42 = por %p40, %p41
    %p43 = scmp.le.s32.totalorder 1, %s7
    // Predicated region
    $region9: #{positional_embedding.1} parent=5 // pred_check
      %p44 = pneg %p43
    $region10: #{positional_embedding.1} parent=5 // pred_check_branch
      %46 = sbr.rel (%p44) target = $region12
    $region11: #{positional_embedding.1} parent=5 // pred_region
      %s47 = ssub.s32 %s7, 1
      // Predicated region
      $region13: #{positional_embedding.1} parent=11 // pred_check
        %p48 = pneg %p42
      $region14: #{positional_embedding.1} parent=11 // pred_check_branch
        %50 = sbr.rel (%p48) target = $region16
      $region15: #{positional_embedding.1} parent=11 // pred_region
        %s51 = smul.u32 2, %s15
        %p52 = scmp.lt.s32.totalorder %s51, 1
        %s53 = scalar_select %p52, %s51, 1
        %s54 = scalar_lea.vmem %s0, %s53
        %s55 = smul.u32 2, %s15
      $region16: #{positional_embedding.1} parent=11 // pred_fallthru
        _
    $region12: #{positional_embedding.1} parent=5 // pred_fallthru
      _
    %p56 = scmp.lt.s32.totalorder %s7, 2
    // Predicated region
    $region17: #{positional_embedding.1} parent=5 // pred_check
      %p57 = pneg %p56
    $region18: #{positional_embedding.1} parent=5 // pred_check_branch
      %59 = sbr.rel (%p57) target = $region20
    $region19: #{positional_embedding.1} parent=5 // pred_region
      _
    $region20: #{positional_embedding.1} parent=5 // pred_fallthru
      _
    %p60 = scmp.le.s32.totalorder 1, %s7
    // Predicated region
    $region21: #{positional_embedding.1} parent=5 // pred_check
      %p61 = pneg %p60
    $region22: #{positional_embedding.1} parent=5 // pred_check_branch
      %63 = sbr.rel (%p61) target = $region24
    $region23: #{positional_embedding.1} parent=5 // pred_region
      %s64 = ssub.s32 %s7, 1
      %s65 = smul.u32 2, %s15
      %p66 = scmp.lt.s32.totalorder %s65, 1
      %s67 = scalar_select %p66, %s65, 1
      %s68 = scalar_lea.vmem %s0, %s67
      %p69 = pneg %p42
      %p70 = pneg %p38
      %s71 = smul.u32 2, %s15
      %p72 = scmp.lt.s32.totalorder %s71, 1
      %s73 = scalar_select %p72, %s71, 1
      %s74 = scalar_lea.vmem %s0, %s73
      %s75 = smul.u32 2, %s15
      %s76 = smul.u32 %s15, 256
      %s77 = sshrl.u32 %s16, 1
      %s78 = sand.u32 %s16, 1
      %s79 = smul.u32 %s77, 4
      %s80 = sadd.s32 %s78, %s79
      %s81 = sshra.s32 %s76, 7
      %s82 = sand.u32 %s76, 127
      %s83 = smul.u32 %s81, 2
      %s84 = sadd.s32 %s83, %s80
      %s85 = scalar_lea.vmem %s1, %s84
      %p87 = scmp.lt.u32.totalorder 1, 8
      %p88 = pneg %p87
      // Predicated region
      $region25: #{positional_embedding.1} parent=23 // pred_check
        _
      $region26: #{positional_embedding.1} parent=23 // pred_check_branch
        %90 = sbr.rel (%p87) target = $region28
      $region27: #{positional_embedding.1} parent=23 // pred_region
        %s107 = sand.u32 1, 7
        %p108 = scmp.eq.s32.totalorder %s107, 0
        %p109 = pneg %p108
        // Predicated region
        $region40: #{positional_embedding.1} parent=27 // pred_check
          _
        $region41: #{positional_embedding.1} parent=27 // pred_check_branch
          %111 = sbr.rel (%p108) target = $region43
        $region42: #{positional_embedding.1} parent=27 // pred_region
          %s112 = sand.u32 1, 7
          %s113 = ssub.s32 1, %s112
          %s114 = scalar_lea.vmem %s74, %s113
          %s115 = ssub.s32 1, %s112
          %s116 = scalar_lea.vmem %s85, %s115
          %s117 = sshllo.u32 0, %s112
          loop: start=0, step=1, limit=1
          $region44: #{positional_embedding.1} parent=42 // loop_pre_header
            _
          $region45: #{positional_embedding.1} parent=42 // loop_header
            %s119 = sphi 0, %s123
            %p120 = scmp.ge.s32.totalorder %s119, 1
            %s124 = sphi %s114, %s114
            %s125 = sphi %s116, %s116
          $region46: #{positional_embedding.1} parent=42 // loop_header_branch
            %122 = sbr.rel (%p120) target = $region50
          $region47: #{positional_embedding.1} parent=42 // loop_body
            %v126 = vld [vmem:[%s124] sm:%s117]
            %127 = vst [vmem:[%s125] sm:%s117] %v126
            %v128 = vld [vmem:[%s124 + $0x1] sm:%s117]
            %129 = vst [vmem:[%s125 + $0x2] sm:%s117] %v128
          $region48: #{positional_embedding.1} parent=42 // loop_footer
            %s123 = sadd.s32 1, %s119
          $region49: #{positional_embedding.1} parent=42 // loop_footer_branch
            %118 = sbr.rel target = $region45
          $region50: #{positional_embedding.1} parent=42 // loop_exit
            _
        $region43: #{positional_embedding.1} parent=27 // pred_fallthru
          _
      $region28: #{positional_embedding.1} parent=23 // pred_fallthru
        _
      // Predicated region
      $region29: #{positional_embedding.1} parent=23 // pred_check
        %p91 = pneg %p87
      $region30: #{positional_embedding.1} parent=23 // pred_check_branch
        %93 = sbr.rel (%p91) target = $region32
      $region31: #{positional_embedding.1} parent=23 // pred_region
        %s94 = sshllo.u32 0, 1
        loop: start=0, step=1, limit=1
        $region33: #{positional_embedding.1} parent=31 // loop_pre_header
          _
        $region34: #{positional_embedding.1} parent=31 // loop_header
          %s96 = sphi 0, %s100
          %p97 = scmp.ge.s32.totalorder %s96, 1
          %s101 = sphi %s74, %s74
          %s102 = sphi %s85, %s85
        $region35: #{positional_embedding.1} parent=31 // loop_header_branch
          %99 = sbr.rel (%p97) target = $region39
        $region36: #{positional_embedding.1} parent=31 // loop_body
          %v103 = vld [vmem:[%s101] sm:%s94]
          %104 = vst [vmem:[%s102] sm:%s94] %v103
          %v105 = vld [vmem:[%s101 + $0x1] sm:%s94]
          %106 = vst [vmem:[%s102 + $0x2] sm:%s94] %v105
        $region37: #{positional_embedding.1} parent=31 // loop_footer
          %s100 = sadd.s32 1, %s96
        $region38: #{positional_embedding.1} parent=31 // loop_footer_branch
          %95 = sbr.rel target = $region34
        $region39: #{positional_embedding.1} parent=31 // loop_exit
          _
      $region32: #{positional_embedding.1} parent=23 // pred_fallthru
        _
      // Predicated region
      $region51: #{positional_embedding.1} parent=23 // pred_check
        _
      $region52: #{positional_embedding.1} parent=23 // pred_check_branch
        %132 = sbr.rel (0) target = $region54
      $region53: #{positional_embedding.1} parent=23 // pred_region
        %133 = vsyncadd [#allocation2], 32
      $region54: #{positional_embedding.1} parent=23 // pred_fallthru
        _
      %s134 = smul.u32 1, 2
      %s135 = sshll.u32 %s134, 4
      %136 = dma.done [#allocation2], %s135
    $region24: #{positional_embedding.1} parent=5 // pred_fallthru
      _
  $region6: #{positional_embedding.1} parent=0 // loop_footer
    %s11 = sadd.s32 1, %s7
  $region7: #{positional_embedding.1} parent=0 // loop_footer_branch
    %6 = sbr.rel target = $region3
  $region8: #{positional_embedding.1} parent=0 // loop_exit
    _
  %137 = vsyncmov [#allocation2]
  %s138 = vpop.sfrf %137
  %p139 = scmp.eq.s32.totalorder %s138, 0
  %p140 = pneg %p139
  %142 = shalt.err (%p140)

</llo_original>
